<compile_context>
chip_gen: v5e
topology: v5e:2x2
jax: 0.10.0
libtpu: 0.0.40
codegen_flags: <defaults>
</compile_context>

<pallas_src>
import jax
import jax.numpy as jnp
from jax.experimental import pallas as pl
from jax.experimental.pallas import tpu as pltpu

LN_EPS = 1e-5  # PyTorch nn.LayerNorm default


def _round_up(n, m):
    return ((n + m - 1) // m) * m


def _mlp_kernel(sm_ref,            # SMEM: [std, mean]
                x_ref, g_ref, beta_ref,
                w1_ref, b1_ref, w2_ref, b2_ref, w3_ref, b3_ref,
                o_ref):
    std = sm_ref[0]
    mean = sm_ref[1]

    x = x_ref[...].astype(jnp.float32)

    # LayerNorm over last dim (biased variance, like torch)
    mu = jnp.mean(x, axis=-1, keepdims=True)
    var = jnp.mean((x - mu) * (x - mu), axis=-1, keepdims=True)
    h = (x - mu) * jax.lax.rsqrt(var + LN_EPS)
    h = h * g_ref[...] + beta_ref[...]

    # Tanh -> Linear -> Tanh -> Linear -> Tanh -> Linear (f32 MXU accumulation)
    h = jnp.tanh(h)
    h = jnp.tanh(jnp.dot(h, w1_ref[...], preferred_element_type=jnp.float32)
                 + b1_ref[...])
    h = jnp.tanh(jnp.dot(h, w2_ref[...], preferred_element_type=jnp.float32)
                 + b2_ref[...])
    y = jnp.dot(h, w3_ref[...], preferred_element_type=jnp.float32) + b3_ref[...]

    o_ref[...] = (y * std + mean).astype(o_ref.dtype)


def mlp_forward(x, params, *, std=1.0, mean=0.0, max_batch_tile=512):
    """x: [B, D_in] float32. params: LayerNorm + 3 Linear layers (weights [in, out])."""
    B, d_in = x.shape
    h_size = params["w1"].shape[1]
    d_out = params["w3"].shape[1]

    # Batch tile: multiple of 8, at most max_batch_tile; pad B so grid is exact.
    tb = min(max_batch_tile, _round_up(B, 8))
    b_pad = _round_up(B, tb)
    if b_pad != B:
        x = jnp.pad(x, ((0, b_pad - B), (0, 0)))
    num_blocks = b_pad // tb

    std_mean = jnp.asarray([std, mean], dtype=jnp.float32)

    const = lambda i: (0, 0)  # weights stay resident across all batch tiles
    in_specs = [
        pl.BlockSpec(memory_space=pltpu.MemorySpace.SMEM),   # [std, mean]
        pl.BlockSpec((tb, d_in), lambda i: (i, 0)),          # x (streamed)
        pl.BlockSpec((1, d_in), const),                      # ln_gamma
        pl.BlockSpec((1, d_in), const),                      # ln_beta
        pl.BlockSpec((d_in, h_size), const),                 # w1
        pl.BlockSpec((1, h_size), const),                    # b1
        pl.BlockSpec((h_size, h_size), const),               # w2
        pl.BlockSpec((1, h_size), const),                    # b2
        pl.BlockSpec((h_size, d_out), const),                # w3
        pl.BlockSpec((1, d_out), const),                     # b3
    ]
    out_specs = pl.BlockSpec((tb, d_out), lambda i: (i, 0))  # y (streamed)
    # TODO(synk): for very narrow d_out, fold 8 batch rows into the lane axis
    # for fully lane-dense stores; large TB already amortizes the masked stores.

    cost = pl.CostEstimate(
        flops=2 * b_pad * (d_in * h_size + h_size * h_size + h_size * d_out),
        transcendentals=b_pad * (d_in + 2 * h_size),
        bytes_accessed=4 * (b_pad * (d_in + d_out)
                            + d_in * h_size + h_size * h_size + h_size * d_out
                            + 2 * d_in + 2 * h_size + d_out + 2),
    )

    y = pl.pallas_call(
        _mlp_kernel,
        out_shape=jax.ShapeDtypeStruct((b_pad, d_out), jnp.float32),
        grid=(num_blocks,),
        in_specs=in_specs,
        out_specs=out_specs,
        compiler_params=pltpu.CompilerParams(
            dimension_semantics=("parallel",),   # megacore split on v7x
        ),
        cost_estimate=cost,
    )(
        std_mean,
        x,
        params["ln_gamma"], params["ln_beta"],
        params["w1"], params["b1"],
        params["w2"], params["b2"],
        params["w3"], params["b3"],
    )

    return y[:B] if b_pad != B else y


def init_params(key, input_size, hidden_size, output_size):
    """Deterministic synthetic init mirroring the PyTorch module's shapes.
    Linear weights stored pre-transposed as [in, out]."""
    ks = jax.random.split(key, 6)

    def linear(kw, kb, fan_in, fan_out):
        bound = 1.0 / jnp.sqrt(jnp.float32(fan_in))
        w = jax.random.uniform(kw, (fan_in, fan_out), jnp.float32, -bound, bound)
        b = jax.random.uniform(kb, (1, fan_out), jnp.float32, -bound, bound)
        return w, b

    w1, b1 = linear(ks[0], ks[1], input_size, hidden_size)
    w2, b2 = linear(ks[2], ks[3], hidden_size, hidden_size)
    w3, b3 = linear(ks[4], ks[5], hidden_size, output_size)
    return {
        "ln_gamma": jnp.ones((1, input_size), jnp.float32),
        "ln_beta": jnp.zeros((1, input_size), jnp.float32),
        "w1": w1, "b1": b1,
        "w2": w2, "b2": b2,
        "w3": w3, "b3": b3,
    }


def mlp_reference(x, params, *, std=1.0, mean=0.0):
    """Pure-JAX reference for correctness checking."""
    mu = jnp.mean(x, axis=-1, keepdims=True)
    var = jnp.mean((x - mu) ** 2, axis=-1, keepdims=True)
    h = (x - mu) / jnp.sqrt(var + LN_EPS)
    h = h * params["ln_gamma"] + params["ln_beta"]
    h = jnp.tanh(h)
    h = jnp.tanh(h @ params["w1"] + params["b1"])
    h = jnp.tanh(h @ params["w2"] + params["b2"])
    y = h @ params["w3"] + params["b3"]
    return y * std + mean


if __name__ == "__main__":
    key = jax.random.PRNGKey(0)
    k_x, k_p, k_x2 = jax.random.split(key, 3)

    batch, input_size, hidden_size, output_size = 8, 32, 32, 16
    params = init_params(k_p, input_size, hidden_size, output_size)

    # Case 1: tile-aligned batch, default std/mean.
    x = jax.random.normal(k_x, (batch, input_size), jnp.float32)
    y = mlp_forward(x, params, std=1.0, mean=0.0)
    jax.block_until_ready(y)
    y_ref = mlp_reference(x, params, std=1.0, mean=0.0)
    assert y.shape == (batch, output_size)
    assert jnp.allclose(y, y_ref, atol=1e-5, rtol=1e-5)

    # Case 2: batch not a multiple of 8 (exercises padding path) + set_normalization.
    batch2 = 37
    x2 = jax.random.normal(k_x2, (batch2, input_size), jnp.float32)
    y2 = mlp_forward(x2, params, std=2.5, mean=-0.75)
    jax.block_until_ready(y2)
    y2_ref = mlp_reference(x2, params, std=2.5, mean=-0.75)
    assert y2.shape == (batch2, output_size)
    assert jnp.allclose(y2, y2_ref, atol=1e-4, rtol=1e-4)

    print("KERNEL_OK")
</pallas_src>

<mosaic_0001>
module attributes {stable_mosaic.version = 11 : i64} {
  func.func @_mlp_kernel(%arg0: i32, %arg1: memref<2xf32, #tpu.memory_space<smem>>, %arg2: memref<8x32xf32, #tpu.memory_space<vmem>>, %arg3: memref<1x32xf32, #tpu.memory_space<vmem>>, %arg4: memref<1x32xf32, #tpu.memory_space<vmem>>, %arg5: memref<32x32xf32, #tpu.memory_space<vmem>>, %arg6: memref<1x32xf32, #tpu.memory_space<vmem>>, %arg7: memref<32x32xf32, #tpu.memory_space<vmem>>, %arg8: memref<1x32xf32, #tpu.memory_space<vmem>>, %arg9: memref<32x16xf32, #tpu.memory_space<vmem>>, %arg10: memref<1x16xf32, #tpu.memory_space<vmem>>, %arg11: memref<8x16xf32, #tpu.memory_space<vmem>>) attributes {dimension_semantics = [#tpu.dimension_semantics<parallel>], iteration_bounds = array<i64: 1>, scalar_prefetch = 0 : i64, scratch_operands = 0 : i64, tpu.core_type = #tpu.core_type<tc>, window_params = [{transform_indices = @transform_0, window_bounds = array<i64: 2>}, {transform_indices = @transform_1, window_bounds = array<i64: 8, 32>}, {pipeline_mode = #tpu.pipeline_mode<synchronous>, transform_indices = @transform_2, window_bounds = array<i64: 1, 32>}, {pipeline_mode = #tpu.pipeline_mode<synchronous>, transform_indices = @transform_3, window_bounds = array<i64: 1, 32>}, {pipeline_mode = #tpu.pipeline_mode<synchronous>, transform_indices = @transform_4, window_bounds = array<i64: 32, 32>}, {pipeline_mode = #tpu.pipeline_mode<synchronous>, transform_indices = @transform_5, window_bounds = array<i64: 1, 32>}, {pipeline_mode = #tpu.pipeline_mode<synchronous>, transform_indices = @transform_6, window_bounds = array<i64: 32, 32>}, {pipeline_mode = #tpu.pipeline_mode<synchronous>, transform_indices = @transform_7, window_bounds = array<i64: 1, 32>}, {pipeline_mode = #tpu.pipeline_mode<synchronous>, transform_indices = @transform_8, window_bounds = array<i64: 32, 16>}, {pipeline_mode = #tpu.pipeline_mode<synchronous>, transform_indices = @transform_9, window_bounds = array<i64: 1, 16>}, {transform_indices = @transform_10, window_bounds = array<i64: 8, 16>}]} {
    %c0 = arith.constant 0 : index
    %0 = memref.load %arg1[%c0] : memref<2xf32, #tpu.memory_space<smem>>
    %c1 = arith.constant 1 : index
    %1 = memref.load %arg1[%c1] : memref<2xf32, #tpu.memory_space<smem>>
    %c0_0 = arith.constant 0 : index
    %c0_1 = arith.constant 0 : index
    %2 = vector.load %arg2[%c0_0, %c0_1] : memref<8x32xf32, #tpu.memory_space<vmem>>, vector<8x32xf32>
    %cst = arith.constant dense<0.000000e+00> : vector<8xf32>
    %3 = vector.multi_reduction <add>, %2, %cst [1] : vector<8x32xf32> to vector<8xf32>
    %4 = vector.shape_cast %3 : vector<8xf32> to vector<8x1xf32>
    %cst_2 = arith.constant 3.200000e+01 : f32
    %5 = vector.broadcast %cst_2 : f32 to vector<8x1xf32>
    %6 = arith.divf %4, %5 : vector<8x1xf32>
    %7 = vector.broadcast %6 : vector<8x1xf32> to vector<8x32xf32>
    %8 = arith.subf %2, %7 : vector<8x32xf32>
    %9 = vector.broadcast %6 : vector<8x1xf32> to vector<8x32xf32>
    %10 = arith.subf %2, %9 : vector<8x32xf32>
    %11 = arith.mulf %8, %10 : vector<8x32xf32>
    %cst_3 = arith.constant dense<0.000000e+00> : vector<8xf32>
    %12 = vector.multi_reduction <add>, %11, %cst_3 [1] : vector<8x32xf32> to vector<8xf32>
    %13 = vector.shape_cast %12 : vector<8xf32> to vector<8x1xf32>
    %cst_4 = arith.constant 3.200000e+01 : f32
    %14 = vector.broadcast %cst_4 : f32 to vector<8x1xf32>
    %15 = arith.divf %13, %14 : vector<8x1xf32>
    %16 = vector.broadcast %6 : vector<8x1xf32> to vector<8x32xf32>
    %17 = arith.subf %2, %16 : vector<8x32xf32>
    %cst_5 = arith.constant 9.99999974E-6 : f32
    %18 = vector.broadcast %cst_5 : f32 to vector<8x1xf32>
    %19 = arith.addf %15, %18 : vector<8x1xf32>
    %20 = math.rsqrt %19 : vector<8x1xf32>
    %21 = vector.broadcast %20 : vector<8x1xf32> to vector<8x32xf32>
    %22 = arith.mulf %17, %21 : vector<8x32xf32>
    %c0_6 = arith.constant 0 : index
    %c0_7 = arith.constant 0 : index
    %23 = vector.load %arg3[%c0_6, %c0_7] : memref<1x32xf32, #tpu.memory_space<vmem>>, vector<1x32xf32>
    %24 = vector.broadcast %23 : vector<1x32xf32> to vector<8x32xf32>
    %25 = arith.mulf %22, %24 : vector<8x32xf32>
    %c0_8 = arith.constant 0 : index
    %c0_9 = arith.constant 0 : index
    %26 = vector.load %arg4[%c0_8, %c0_9] : memref<1x32xf32, #tpu.memory_space<vmem>>, vector<1x32xf32>
    %27 = vector.broadcast %26 : vector<1x32xf32> to vector<8x32xf32>
    %28 = arith.addf %25, %27 : vector<8x32xf32>
    %29 = math.tanh %28 : vector<8x32xf32>
    %c0_10 = arith.constant 0 : index
    %c0_11 = arith.constant 0 : index
    %30 = vector.load %arg5[%c0_10, %c0_11] : memref<32x32xf32, #tpu.memory_space<vmem>>, vector<32x32xf32>
    %cst_12 = arith.constant dense<0.000000e+00> : vector<8x32xf32>
    %31 = tpu.matmul %29, %30, %cst_12 {dimension_numbers = #tpu.dot_dimension_numbers<[1], [0], [0], [1], [0, 0, 1, 1], [], []>} : vector<8x32xf32>, vector<32x32xf32>, vector<8x32xf32> -> vector<8x32xf32>
    %c0_13 = arith.constant 0 : index
    %c0_14 = arith.constant 0 : index
    %32 = vector.load %arg6[%c0_13, %c0_14] : memref<1x32xf32, #tpu.memory_space<vmem>>, vector<1x32xf32>
    %33 = vector.broadcast %32 : vector<1x32xf32> to vector<8x32xf32>
    %34 = arith.addf %31, %33 : vector<8x32xf32>
    %35 = math.tanh %34 : vector<8x32xf32>
    %c0_15 = arith.constant 0 : index
    %c0_16 = arith.constant 0 : index
    %36 = vector.load %arg7[%c0_15, %c0_16] : memref<32x32xf32, #tpu.memory_space<vmem>>, vector<32x32xf32>
    %cst_17 = arith.constant dense<0.000000e+00> : vector<8x32xf32>
    %37 = tpu.matmul %35, %36, %cst_17 {dimension_numbers = #tpu.dot_dimension_numbers<[1], [0], [0], [1], [0, 0, 1, 1], [], []>} : vector<8x32xf32>, vector<32x32xf32>, vector<8x32xf32> -> vector<8x32xf32>
    %c0_18 = arith.constant 0 : index
    %c0_19 = arith.constant 0 : index
    %38 = vector.load %arg8[%c0_18, %c0_19] : memref<1x32xf32, #tpu.memory_space<vmem>>, vector<1x32xf32>
    %39 = vector.broadcast %38 : vector<1x32xf32> to vector<8x32xf32>
    %40 = arith.addf %37, %39 : vector<8x32xf32>
    %41 = math.tanh %40 : vector<8x32xf32>
    %c0_20 = arith.constant 0 : index
    %c0_21 = arith.constant 0 : index
    %42 = vector.load %arg9[%c0_20, %c0_21] : memref<32x16xf32, #tpu.memory_space<vmem>>, vector<32x16xf32>
    %cst_22 = arith.constant dense<0.000000e+00> : vector<8x16xf32>
    %43 = tpu.matmul %41, %42, %cst_22 {dimension_numbers = #tpu.dot_dimension_numbers<[1], [0], [0], [1], [0, 0, 1, 1], [], []>} : vector<8x32xf32>, vector<32x16xf32>, vector<8x16xf32> -> vector<8x16xf32>
    %c0_23 = arith.constant 0 : index
    %c0_24 = arith.constant 0 : index
    %44 = vector.load %arg10[%c0_23, %c0_24] : memref<1x16xf32, #tpu.memory_space<vmem>>, vector<1x16xf32>
    %45 = vector.broadcast %44 : vector<1x16xf32> to vector<8x16xf32>
    %46 = arith.addf %43, %45 : vector<8x16xf32>
    %47 = vector.broadcast %0 : f32 to vector<8x16xf32>
    %48 = arith.mulf %46, %47 : vector<8x16xf32>
    %49 = vector.broadcast %1 : f32 to vector<8x16xf32>
    %50 = arith.addf %48, %49 : vector<8x16xf32>
    %c0_25 = arith.constant 0 : index
    %c0_26 = arith.constant 0 : index
    %51 = vector.load %arg11[%c0_25, %c0_26] : memref<8x16xf32, #tpu.memory_space<vmem>>, vector<8x16xf32>
    tpu.vector_store %arg11[%c0_25, %c0_26], %50 {strides = array<i32>} : memref<8x16xf32, #tpu.memory_space<vmem>>, vector<8x16xf32>,
    return
  }
  func.func @transform_0(%arg0: i32) -> i32 {
    %c0_i32 = arith.constant 0 : i32
    %c0_i32_0 = arith.constant 0 : i32
    return %c0_i32 : i32
  }
  func.func @transform_1(%arg0: i32) -> (i32, i32) {
    %c0_i32 = arith.constant 0 : i32
    %c0_i32_0 = arith.constant 0 : i32
    return %arg0, %c0_i32 : i32, i32
  }
  func.func @transform_2(%arg0: i32) -> (i32, i32) {
    %c0_i32 = arith.constant 0 : i32
    %c0_i32_0 = arith.constant 0 : i32
    %c0_i32_1 = arith.constant 0 : i32
    return %c0_i32, %c0_i32_0 : i32, i32
  }
  func.func @transform_3(%arg0: i32) -> (i32, i32) {
    %c0_i32 = arith.constant 0 : i32
    %c0_i32_0 = arith.constant 0 : i32
    %c0_i32_1 = arith.constant 0 : i32
    return %c0_i32, %c0_i32_0 : i32, i32
  }
  func.func @transform_4(%arg0: i32) -> (i32, i32) {
    %c0_i32 = arith.constant 0 : i32
    %c0_i32_0 = arith.constant 0 : i32
    %c0_i32_1 = arith.constant 0 : i32
    return %c0_i32, %c0_i32_0 : i32, i32
  }
  func.func @transform_5(%arg0: i32) -> (i32, i32) {
    %c0_i32 = arith.constant 0 : i32
    %c0_i32_0 = arith.constant 0 : i32
    %c0_i32_1 = arith.constant 0 : i32
    return %c0_i32, %c0_i32_0 : i32, i32
  }
  func.func @transform_6(%arg0: i32) -> (i32, i32) {
    %c0_i32 = arith.constant 0 : i32
    %c0_i32_0 = arith.constant 0 : i32
    %c0_i32_1 = arith.constant 0 : i32
    return %c0_i32, %c0_i32_0 : i32, i32
  }
  func.func @transform_7(%arg0: i32) -> (i32, i32) {
    %c0_i32 = arith.constant 0 : i32
    %c0_i32_0 = arith.constant 0 : i32
    %c0_i32_1 = arith.constant 0 : i32
    return %c0_i32, %c0_i32_0 : i32, i32
  }
  func.func @transform_8(%arg0: i32) -> (i32, i32) {
    %c0_i32 = arith.constant 0 : i32
    %c0_i32_0 = arith.constant 0 : i32
    %c0_i32_1 = arith.constant 0 : i32
    return %c0_i32, %c0_i32_0 : i32, i32
  }
  func.func @transform_9(%arg0: i32) -> (i32, i32) {
    %c0_i32 = arith.constant 0 : i32
    %c0_i32_0 = arith.constant 0 : i32
    %c0_i32_1 = arith.constant 0 : i32
    return %c0_i32, %c0_i32_0 : i32, i32
  }
  func.func @transform_10(%arg0: i32) -> (i32, i32) {
    %c0_i32 = arith.constant 0 : i32
    %c0_i32_0 = arith.constant 0 : i32
    return %arg0, %c0_i32 : i32, i32
  }
}

</mosaic_0001>

<llo_original>
// kernel: tpu_custom_call.1
$region0: #{tpu_custom_call.1}
  #allocation0 [shape = 'u32[]', space=smem, size = 0x4, offset = 0x4, fixed_abs, tag = 'smem constant byte address 0x4 - core index']
  #allocation1 [shape = 'u32[72,128]{1,0:T(1,128)}', space=vmem, size = 0x9000, scoped, tag = 'internal scratch']
  %s0 = inlined_call_operand.vmem [shape: f32[2], index: 0, kind: input, shape index: {}]
  %s1 = inlined_call_operand.vmem [shape: f32[8,32], index: 1, kind: input, shape index: {}]
  %s2 = inlined_call_operand.vmem [shape: f32[1,32], index: 2, kind: input, shape index: {}]
  %s3 = inlined_call_operand.vmem [shape: f32[1,32], index: 3, kind: input, shape index: {}]
  %s4 = inlined_call_operand.vmem [shape: f32[32,32], index: 4, kind: input, shape index: {}]
  %s5 = inlined_call_operand.vmem [shape: f32[1,32], index: 5, kind: input, shape index: {}]
  %s6 = inlined_call_operand.hbm [shape: f32[32,32], index: 6, kind: input, shape index: {}]
  %s7 = inlined_call_operand.vmem [shape: f32[1,32], index: 7, kind: input, shape index: {}]
  %s8 = inlined_call_operand.vmem [shape: f32[32,16], index: 8, kind: input, shape index: {}]
  %s9 = inlined_call_operand.vmem [shape: f32[1,16], index: 9, kind: input, shape index: {}]
  %s10 = inlined_call_operand.hbm [shape: f32[8,16], index: 10, kind: output, shape index: {}]
  %s11 = sld [smem:[#allocation0]]
  $region58: #{tpu_custom_call.1} parent=0
    _
  %s13 = ssub.s32 1, %s11
  %s14 = scalar_select 0, %s13, %s11
  $region1: #{tpu_custom_call.1} parent=0
    #allocation2 [shape = 'u8[512]{0}', space=smem, size = 0x200, scoped, tag = 'input window, operand 0, single buffered']
    #allocation3 [shape = 's32[1]{0}', space=sflag, size = 0x4, scoped, tag = 'scoped memory for tpu_custom_call.1']
    #allocation4 [shape = 's32[1]{0}', space=sflag, size = 0x4, scoped, tag = 'scoped memory for tpu_custom_call.1']
    #allocation5 [shape = 's32[1]{0}', space=sflag, size = 0x4, scoped, tag = 'scoped memory for tpu_custom_call.1']
    #allocation6 [shape = 'u8[16384]{0}', space=vmem, size = 0x4000, scoped, tag = 'input window, operand 6, single buffered']
    #allocation7 [shape = 'u8[4096]{0}', space=vmem, size = 0x1000, scoped, tag = 'output window, operand 0, single buffered']
    %15 = vsyncpa [#allocation5], 0
    %16 = vsyncpa [#allocation3], 0
    %17 = vsyncpa [#allocation4], 0
    // Predicated region
    $region2: #{tpu_custom_call.1} parent=1 // pred_check
      _
    $region3: #{tpu_custom_call.1} parent=1 // pred_check_branch
      %19 = sbr.rel (0) target = $region5
    $region4: #{tpu_custom_call.1} parent=1 // pred_region
      %21 = vsyncadd [#allocation5], 0
      %s23 = sshll.u32 %s0, 4
      %s24 = int_to_ptr.vmem [resolvable:$true] %s23
      %26 = dma.vmem_to_smem %s24, 16, [#allocation2], [#allocation5]
    $region5: #{tpu_custom_call.1} parent=1 // pred_fallthru
      _
    // Predicated region
    $region6: #{tpu_custom_call.1} parent=1 // pred_check
      _
    $region7: #{tpu_custom_call.1} parent=1 // pred_check_branch
      %28 = sbr.rel (0) target = $region9
    $region8: #{tpu_custom_call.1} parent=1 // pred_region
      _
    $region9: #{tpu_custom_call.1} parent=1 // pred_fallthru
      _
    // Predicated region
    $region10: #{tpu_custom_call.1} parent=1 // pred_check
      _
    $region11: #{tpu_custom_call.1} parent=1 // pred_check_branch
      %30 = sbr.rel (0) target = $region13
    $region12: #{tpu_custom_call.1} parent=1 // pred_region
      _
    $region13: #{tpu_custom_call.1} parent=1 // pred_fallthru
      _
    // Predicated region
    $region14: #{tpu_custom_call.1} parent=1 // pred_check
      _
    $region15: #{tpu_custom_call.1} parent=1 // pred_check_branch
      %32 = sbr.rel (0) target = $region17
    $region16: #{tpu_custom_call.1} parent=1 // pred_region
      _
    $region17: #{tpu_custom_call.1} parent=1 // pred_fallthru
      _
    // Predicated region
    $region18: #{tpu_custom_call.1} parent=1 // pred_check
      _
    $region19: #{tpu_custom_call.1} parent=1 // pred_check_branch
      %34 = sbr.rel (0) target = $region21
    $region20: #{tpu_custom_call.1} parent=1 // pred_region
      _
    $region21: #{tpu_custom_call.1} parent=1 // pred_fallthru
      _
    // Predicated region
    $region22: #{tpu_custom_call.1} parent=1 // pred_check
      _
    $region23: #{tpu_custom_call.1} parent=1 // pred_check_branch
      %36 = sbr.rel (0) target = $region25
    $region24: #{tpu_custom_call.1} parent=1 // pred_region
      _
    $region25: #{tpu_custom_call.1} parent=1 // pred_fallthru
      _
    // Predicated region
    $region26: #{tpu_custom_call.1} parent=1 // pred_check
      _
    $region27: #{tpu_custom_call.1} parent=1 // pred_check_branch
      %38 = sbr.rel (0) target = $region29
    $region28: #{tpu_custom_call.1} parent=1 // pred_region
      %40 = vsyncadd [#allocation3], 0
      %s41 = sshll.u32 %s6, 4
      %s42 = int_to_ptr.hbm [resolvable:$true] %s41
      %s43 = sshll.u32 [#allocation6], 4
      %s44 = int_to_ptr.vmem [resolvable:$true] %s43
      %49 = dma.hbm_to_vmem [thread:$0]  %s42, 512, %s44, [#allocation3], 128, 128, 8
    $region29: #{tpu_custom_call.1} parent=1 // pred_fallthru
      _
    // Predicated region
    $region30: #{tpu_custom_call.1} parent=1 // pred_check
      _
    $region31: #{tpu_custom_call.1} parent=1 // pred_check_branch
      %51 = sbr.rel (0) target = $region33
    $region32: #{tpu_custom_call.1} parent=1 // pred_region
      _
    $region33: #{tpu_custom_call.1} parent=1 // pred_fallthru
      _
    // Predicated region
    $region34: #{tpu_custom_call.1} parent=1 // pred_check
      _
    $region35: #{tpu_custom_call.1} parent=1 // pred_check_branch
      %53 = sbr.rel (0) target = $region37
    $region36: #{tpu_custom_call.1} parent=1 // pred_region
      _
    $region37: #{tpu_custom_call.1} parent=1 // pred_fallthru
      _
    // Predicated region
    $region38: #{tpu_custom_call.1} parent=1 // pred_check
      _
    $region39: #{tpu_custom_call.1} parent=1 // pred_check_branch
      %55 = sbr.rel (0) target = $region41
    $region40: #{tpu_custom_call.1} parent=1 // pred_region
      _
    $region41: #{tpu_custom_call.1} parent=1 // pred_fallthru
      _
    // Predicated region
    $region42: #{tpu_custom_call.1} parent=1 // pred_check
      _
    $region43: #{tpu_custom_call.1} parent=1 // pred_check_branch
      %57 = sbr.rel (0) target = $region45
    $region44: #{tpu_custom_call.1} parent=1 // pred_region
      %59 = dma.done [#allocation5], 16
    $region45: #{tpu_custom_call.1} parent=1 // pred_fallthru
      _
    // Predicated region
    $region46: #{tpu_custom_call.1} parent=1 // pred_check
      _
    $region47: #{tpu_custom_call.1} parent=1 // pred_check_branch
      %61 = sbr.rel (0) target = $region49
    $region48: #{tpu_custom_call.1} parent=1 // pred_region
      %63 = dma.done [#allocation3], 512
    $region49: #{tpu_custom_call.1} parent=1 // pred_fallthru
      _
    %64 = sfence
    %s65 = sld [smem:[#allocation2]]
    %s66 = sld [smem:[#allocation2 + $0x1]]
    %v67 = vld [vmem:[%s1] sm:$0xff]
    %vm68 = vcmask 261120
    %v69 = vsel %vm68, %v67, 0.0
    %70 = vadd.xlane.f32.xlu0 %v69
    %v71 = vpop.xlane.xlu0 %70
    %v72 = vrcp.pop 32.0
    %v73 = vmul.f32 32.0, %v72
    %v74 = vsub.f32 1.0, %v73
    %v75 = vmul.f32 %v72, %v74
    %v76 = vadd.f32 %v72, %v75
    %vm77 = vweird.f32 %v72
    %v78 = vsel %vm77, %v72, %v76
    %v79 = vmul.f32 %v71, %v78
    %v80 = vsub.f32 %v67, %v79
    %v81 = vmul.f32 %v80, %v80
    %v82 = vsel %vm68, %v81, 0.0
    %83 = vadd.xlane.f32.xlu0 %v82
    %v84 = vpop.xlane.xlu0 %83
    %v85 = vmul.f32 %v84, %v78
    %v86 = vadd.f32 %v85, 1e-05
    %v87 = vrsqrt.pop %v86
    %v88 = vmul.f32 %v87, %v86
    %v89 = vmul.f32 %v88, %v87
    %v90 = vmul.f32 0.5, %v89
    %v91 = vsub.f32 1.5, %v90
    %v92 = vmul.f32 %v87, %v91
    %vm93 = vweird.f32 %v86
    %vm94 = vweird.f32 %v87
    %vm95 = vmor %vm93, %vm94
    %v96 = vsel %vm95, %v87, %v92
    %v97 = vmul.f32 %v80, %v96
    %v98 = vld [vmem:[%s2] sm:$0x1]
    %v100 = vperm.slane %v98, 0
    %v102 = vmul.f32 %v97, %v100
    %v103 = vld [vmem:[%s3] sm:$0x1]
    %v105 = vperm.slane %v103, 0
    %v107 = vadd.f32 %v102, %v105
    %v108 = vtanh.pop %v107
    %v109 = vld [vmem:[%s4] sm:$0xff]
    %v110 = vld [vmem:[%s4 + $0x8] sm:$0xff]
    %v111 = vld [vmem:[%s4 + $0x10] sm:$0xff]
    %v112 = vld [vmem:[%s4 + $0x18] sm:$0xff]
    %v113 = vld [vmem:[%s5] sm:$0x1]
    %v115 = vperm.slane %v113, 0
    %v118 = vsel %vm68, %v108, 0
    %120 = vmatpush.msra.mxu0 0.0
    %121 = vmatpush.msra.mxu0 0.0
    %122 = vmatpush.msra.mxu0 0.0
    %123 = vmatpush.msra.mxu0 0.0
    %124 = vmatpush.msra.mxu0 0.0
    %125 = vmatpush.msra.mxu0 0.0
    %126 = vmatpush.msra.mxu0 0.0
    %127 = vmatpush.msra.mxu0 0.0
    %128 = vmatpush.msra.mxu0 0.0
    %129 = vmatpush.msra.mxu0 0.0
    %130 = vmatpush.msra.mxu0 0.0
    %131 = vmatpush.msra.mxu0 0.0
    %132 = vmatpush.msra.mxu0 %v112
    %133 = vmatpush.msra.mxu0 %v111
    %134 = vmatpush.msra.mxu0 %v110
    %135 = vmatpush.msra.mxu0 %v109
    %136 = vmatmul.f32.gmra.mxu0 %v118
    %v137 = vpop.f32.mrf.mxu0
    %v138 = vadd.f32 %v115, %v137
    %139 = vdwg.mxu0
    %v140 = vtanh.pop %v138
    %v141 = vld [vmem:[#allocation6] sm:$0xff]
    %v142 = vld [vmem:[#allocation6 + $0x8] sm:$0xff]
    %v143 = vld [vmem:[#allocation6 + $0x10] sm:$0xff]
    %v144 = vld [vmem:[#allocation6 + $0x18] sm:$0xff]
    %v145 = vld [vmem:[%s7] sm:$0x1]
    %v147 = vperm.slane %v145, 0
    %v150 = vsel %vm68, %v140, 0
    %152 = vmatpush.msra.mxu0 0.0
    %153 = vmatpush.msra.mxu0 0.0
    %154 = vmatpush.msra.mxu0 0.0
    %155 = vmatpush.msra.mxu0 0.0
    %156 = vmatpush.msra.mxu0 0.0
    %157 = vmatpush.msra.mxu0 0.0
    %158 = vmatpush.msra.mxu0 0.0
    %159 = vmatpush.msra.mxu0 0.0
    %160 = vmatpush.msra.mxu0 0.0
    %161 = vmatpush.msra.mxu0 0.0
    %162 = vmatpush.msra.mxu0 0.0
    %163 = vmatpush.msra.mxu0 0.0
    %164 = vmatpush.msra.mxu0 %v144
    %165 = vmatpush.msra.mxu0 %v143
    %166 = vmatpush.msra.mxu0 %v142
    %167 = vmatpush.msra.mxu0 %v141
    %168 = vmatmul.f32.gmra.mxu0 %v150
    %v169 = vpop.f32.mrf.mxu0
    %v170 = vadd.f32 %v147, %v169
    %171 = vdwg.mxu0
    %v172 = vtanh.pop %v170
    %v173 = vld [vmem:[%s8] sm:$0xff]
    %v174 = vld [vmem:[%s8 + $0x8] sm:$0xff]
    %v175 = vld [vmem:[%s8 + $0x10] sm:$0xff]
    %v176 = vld [vmem:[%s8 + $0x18] sm:$0xff]
    %v177 = vld [vmem:[%s9] sm:$0x1]
    %v179 = vperm.slane %v177, 0
    %v182 = vsel %vm68, %v172, 0
    %184 = vmatpush.msra.mxu0 0.0
    %185 = vmatpush.msra.mxu0 0.0
    %186 = vmatpush.msra.mxu0 0.0
    %187 = vmatpush.msra.mxu0 0.0
    %188 = vmatpush.msra.mxu0 0.0
    %189 = vmatpush.msra.mxu0 0.0
    %190 = vmatpush.msra.mxu0 0.0
    %191 = vmatpush.msra.mxu0 0.0
    %192 = vmatpush.msra.mxu0 0.0
    %193 = vmatpush.msra.mxu0 0.0
    %194 = vmatpush.msra.mxu0 0.0
    %195 = vmatpush.msra.mxu0 0.0
    %196 = vmatpush.msra.mxu0 %v176
    %197 = vmatpush.msra.mxu0 %v175
    %198 = vmatpush.msra.mxu0 %v174
    %199 = vmatpush.msra.mxu0 %v173
    %200 = vmatmul.f32.gmra.mxu0 %v182
    %v201 = vpop.f32.mrf.mxu0
    %v202 = vadd.f32 %v179, %v201
    %203 = vdwg.mxu0
    %v204 = vstv %s65
    %v205 = vmul.f32 %v202, %v204
    %v206 = vstv %s66
    %v207 = vadd.f32 %v205, %v206
    %vm208 = vcmask 130048
    %209 = vst.msk [vmem:[#allocation7] sm:$0xff] %vm208, %v207
    // Predicated region
    $region50: #{tpu_custom_call.1} parent=1 // pred_check
      _
    $region51: #{tpu_custom_call.1} parent=1 // pred_check_branch
      %211 = sbr.rel (0) target = $region53
    $region52: #{tpu_custom_call.1} parent=1 // pred_region
      %213 = vsyncadd [#allocation4], 0
      %s215 = sshll.u32 [#allocation7], 4
      %s216 = int_to_ptr.vmem [resolvable:$true] %s215
      %s217 = sshll.u32 %s10, 4
      %s218 = int_to_ptr.hbm [resolvable:$true] %s217
      %220 = dma.vmem_to_hbm [thread:$0]  %s216, 128, %s218, [#allocation4]
    $region53: #{tpu_custom_call.1} parent=1 // pred_fallthru
      _
    // Predicated region
    $region54: #{tpu_custom_call.1} parent=1 // pred_check
      _
    $region55: #{tpu_custom_call.1} parent=1 // pred_check_branch
      %222 = sbr.rel (0) target = $region57
    $region56: #{tpu_custom_call.1} parent=1 // pred_region
      %224 = dma.done [#allocation4], 128
    $region57: #{tpu_custom_call.1} parent=1 // pred_fallthru
      _
    %225 = vsyncpa [#allocation3], 1
    %226 = vsyncpa [#allocation4], 1
    %227 = vsyncpa [#allocation5], 1

</llo_original>
